<compile_context>
chip_gen: v7x
topology: tpu7x:2x2x1
jax: 0.10.0
libtpu: 0.0.40
codegen_flags: <defaults>
</compile_context>

<pallas_src>
import jax
import jax.numpy as jnp
import numpy as np
from jax.experimental import pallas as pl
from jax.experimental.pallas import tpu as pltpu

K = 8  # JPEG block size
_LANES = 128
_C_CANDIDATES = (4096, 2048, 1024, 512, 256, 128)
_MIN_GRID_STEPS = 4  # target >= this many grid steps for pipelining/megacore

# Standard JPEG luminance quantization table (transposed, as in DiffJPEG).
Y_TABLE = np.array(
    [[16, 11, 10, 16, 24, 40, 51, 61],
     [12, 12, 14, 19, 26, 58, 60, 55],
     [14, 13, 16, 24, 40, 57, 69, 56],
     [14, 17, 22, 29, 51, 87, 80, 62],
     [18, 22, 37, 56, 68, 109, 103, 77],
     [24, 35, 55, 64, 81, 104, 113, 92],
     [49, 64, 78, 87, 103, 121, 120, 101],
     [72, 92, 95, 98, 112, 100, 103, 99]],
    dtype=np.float32).T


def _y_dequant_kernel(x_ref, t_ref, o_ref):
    # x_ref: (TR, C) lane-dense tile of flattened 8x8 blocks (image dtype)
    # t_ref: (1, C)  factor-scaled y_table in f32, tiled along lanes (period 64)
    # o_ref: (TR, C) image dtype
    x = x_ref[...].astype(jnp.float32)          # compute in f32, cast output only
    o_ref[...] = (x * t_ref[...]).astype(o_ref.dtype)


def _vmem_budgets():
    """Generation-aware (tile_bytes, vmem_limit_bytes)."""
    try:
        info = pltpu.get_tpu_info()
        cap = int(getattr(info, "vmem_capacity_bytes", 64 << 20))
    except Exception:  # pragma: no cover - e.g. interpret mode / CPU
        cap = 64 << 20
    # 128 MiB VMEM (v5e/v6e) -> 8 MiB tiles; 64 MiB (v7x per TC) -> 4 MiB.
    tile = max(1 << 20, min(cap // 16, 8 << 20))
    # Double-buffered input + output ~= 4x tile, plus slack; never below the
    # 32 MiB default scoped limit, never above half of physical VMEM.
    vmem_limit = int(min(cap // 2, max(32 << 20, 4 * tile + (2 << 20))))
    return tile, vmem_limit


def _choose_layout(total_padded: int, itemsize: int, tile_budget: int):
    """Row-major 2-D view (R, C) of the (lane-padded) flat stream + row tile TR.

    C is a multiple of 128 (full-lane unmasked stores) and of 64 (whole 8x8
    blocks per row).  TR is a multiple of the dtype's sublane packing (8 for
    f32, 16 for bf16, 32 for 1-byte dtypes) or equals the full row count."""
    assert total_padded % _LANES == 0
    sub = max(8, 32 // itemsize)  # sublane packing rows for this dtype

    divisors = [c for c in _C_CANDIDATES if total_padded % c == 0]
    C = divisors[0]
    for cand in divisors:
        if total_padded // cand >= _MIN_GRID_STEPS * sub:
            C = cand
            break

    R = total_padded // C
    if R <= sub:
        TR = R  # block dim equals full array dim -> always legal (tiny input)
    else:
        rows_budget = max(sub, (tile_budget // (C * itemsize)) // sub * sub)
        rows_steps = max(sub, (-(-R // _MIN_GRID_STEPS)) // sub * sub)
        TR = min(rows_budget, rows_steps)
    return R, C, TR


def y_dequantize(image: jax.Array, factor=1.0, *, donate_image: bool = False):
    """image: (..., 8, 8) -> image * (y_table * factor), same shape/dtype.

    `factor` may be a Python float or a (traced) scalar array.
    `donate_image=True` aliases the image buffer to the output (only useful
    when the caller actually donates the buffer, e.g. inside a jitted
    DiffJPEG pipeline; otherwise XLA inserts a defensive copy)."""
    assert image.shape[-2:] == (K, K), "trailing dims must be (8, 8)"
    orig_shape = image.shape
    dtype = image.dtype
    itemsize = jnp.dtype(dtype).itemsize

    total = int(np.prod(orig_shape))
    pad = (-total) % _LANES  # pad the flat view up to a full 128-lane multiple
    flat = image.reshape(-1)
    if pad:
        flat = jnp.concatenate([flat, jnp.zeros((pad,), dtype=dtype)])
    total_p = total + pad

    tile_budget, vmem_limit = _vmem_budgets()
    R, C, TR = _choose_layout(total_p, itemsize, tile_budget)

    # Lane-dense, byte-identical row-major view of the (padded) input.
    x2d = flat.reshape(R, C)

    # factor may be traced/learnable: keep everything in f32 (no concretization).
    factor_f32 = jnp.asarray(factor, jnp.float32)
    table = jnp.asarray(Y_TABLE) * factor_f32                       # (8, 8) f32
    table_row = jnp.tile(table.reshape(1, K * K), (1, C // (K * K)))  # (1, C) f32

    cost = pl.CostEstimate(
        flops=R * C,
        transcendentals=0,
        bytes_accessed=2 * R * C * itemsize + C * 4,
    )

    out2d = pl.pallas_call(
        _y_dequant_kernel,
        out_shape=jax.ShapeDtypeStruct((R, C), dtype),
        grid_spec=pltpu.PrefetchScalarGridSpec(
            num_scalar_prefetch=0,
            grid=(pl.cdiv(R, TR),),
            in_specs=[
                pl.BlockSpec((TR, C), lambda r: (r, 0)),
                pl.BlockSpec((1, C), lambda r: (0, 0)),
            ],
            out_specs=pl.BlockSpec((TR, C), lambda r: (r, 0)),
        ),
        compiler_params=pltpu.CompilerParams(
            dimension_semantics=("parallel",),
            vmem_limit_bytes=vmem_limit,
        ),
        cost_estimate=cost,
        input_output_aliases=({0: 0} if donate_image else {}),
    )(x2d, table_row)

    out_flat = out2d.reshape(-1)
    if pad:
        out_flat = out_flat[:total]
    # Free reshape back to the caller's layout (same row-major bytes).
    return out_flat.reshape(orig_shape)


def _reference(image, factor: float) -> np.ndarray:
    # Mirror of the torch forward: image * (y_table * factor)
    return np.asarray(image) * (Y_TABLE * np.float32(factor))


if __name__ == "__main__":
    key = jax.random.PRNGKey(0)
    k1, k2, k3, k4 = jax.random.split(key, 4)

    # batch=2, 4 blocks (a 16x16 Y channel split into 8x8 blocks).
    img = jax.random.normal(k1, (2, 4, K, K), dtype=jnp.float32)
    out = jax.block_until_ready(y_dequantize(img, 1.0))
    assert out.shape == img.shape
    np.testing.assert_allclose(np.asarray(out), _reference(img, 1.0),
                               rtol=0, atol=0)

    # Ragged shape: exercises row tiling, >=4 grid steps, masked edge block.
    img2 = jax.random.normal(k2, (4, 129, K, K), dtype=jnp.float32)
    out2 = jax.block_until_ready(y_dequantize(img2, 2.0))
    assert out2.shape == img2.shape
    np.testing.assert_allclose(np.asarray(out2), _reference(img2, 2.0),
                               rtol=0, atol=0)

    # Odd number of 8x8 blocks: total elements % 128 != 0 -> lane-pad path.
    img3 = jax.random.normal(k3, (1, 3, K, K), dtype=jnp.float32)
    out3 = jax.block_until_ready(y_dequantize(img3, 1.0))
    assert out3.shape == img3.shape
    np.testing.assert_allclose(np.asarray(out3), _reference(img3, 1.0),
                               rtol=0, atol=0)

    # bf16 input: product computed in f32, only the output is cast.
    img4 = jax.random.normal(k4, (2, 4, K, K), dtype=jnp.bfloat16)
    out4 = jax.block_until_ready(y_dequantize(img4, 1.0))
    ref4 = np.asarray(img4).astype(np.float32) * Y_TABLE
    np.testing.assert_allclose(np.asarray(out4).astype(np.float32), ref4,
                               rtol=1e-2, atol=1e-2)

    # Traced (learnable) factor under jit.
    out5 = jax.block_until_ready(jax.jit(y_dequantize)(img, jnp.float32(0.5)))
    np.testing.assert_allclose(np.asarray(out5), _reference(img, 0.5),
                               rtol=0, atol=0)

    print("KERNEL_OK")
</pallas_src>

<mosaic_0001>
module attributes {stable_mosaic.version = 11 : i64} {
  func.func @_y_dequant_kernel(%arg0: i32, %arg1: memref<1x512xf32, #tpu.memory_space<vmem>>, %arg2: memref<1x512xf32, #tpu.memory_space<vmem>>, %arg3: memref<1x512xf32, #tpu.memory_space<vmem>>) attributes {dimension_semantics = [#tpu.dimension_semantics<parallel>], iteration_bounds = array<i64: 1>, scalar_prefetch = 0 : i64, scratch_operands = 0 : i64, tpu.core_type = #tpu.core_type<tc>, window_params = [{transform_indices = @transform_0, window_bounds = array<i64: 1, 512>}, {pipeline_mode = #tpu.pipeline_mode<synchronous>, transform_indices = @transform_1, window_bounds = array<i64: 1, 512>}, {transform_indices = @transform_2, window_bounds = array<i64: 1, 512>}]} {
    %c0 = arith.constant 0 : index
    %c0_0 = arith.constant 0 : index
    %0 = vector.load %arg1[%c0, %c0_0] : memref<1x512xf32, #tpu.memory_space<vmem>>, vector<1x512xf32>
    %c0_1 = arith.constant 0 : index
    %c0_2 = arith.constant 0 : index
    %1 = vector.load %arg2[%c0_1, %c0_2] : memref<1x512xf32, #tpu.memory_space<vmem>>, vector<1x512xf32>
    %2 = arith.mulf %0, %1 : vector<1x512xf32>
    %c0_3 = arith.constant 0 : index
    %c0_4 = arith.constant 0 : index
    %3 = vector.load %arg3[%c0_3, %c0_4] : memref<1x512xf32, #tpu.memory_space<vmem>>, vector<1x512xf32>
    tpu.vector_store %arg3[%c0_3, %c0_4], %2 {strides = array<i32>} : memref<1x512xf32, #tpu.memory_space<vmem>>, vector<1x512xf32>,
    return
  }
  func.func @transform_0(%arg0: i32) -> (i32, i32) {
    %c0_i32 = arith.constant 0 : i32
    %c0_i32_0 = arith.constant 0 : i32
    return %arg0, %c0_i32 : i32, i32
  }
  func.func @transform_1(%arg0: i32) -> (i32, i32) {
    %c0_i32 = arith.constant 0 : i32
    %c0_i32_0 = arith.constant 0 : i32
    %c0_i32_1 = arith.constant 0 : i32
    return %c0_i32, %c0_i32_0 : i32, i32
  }
  func.func @transform_2(%arg0: i32) -> (i32, i32) {
    %c0_i32 = arith.constant 0 : i32
    %c0_i32_0 = arith.constant 0 : i32
    return %arg0, %c0_i32 : i32, i32
  }
}

</mosaic_0001>

<llo_original>
// kernel: tpu_custom_call.1
$region0: #{tpu_custom_call.1}
  #allocation0 [shape = 'u32[]', space=smem, size = 0x4, offset = 0x4, fixed_abs, tag = 'smem constant byte address 0x4 - core index']
  #allocation1 [shape = 'u32[144,128]{1,0:T(1,128)}', space=vmem, size = 0x12000, scoped, tag = 'internal scratch']
  %s0 = inlined_call_operand.hbm [shape: f32[1,512], index: 0, kind: input, shape index: {}]
  %s1 = inlined_call_operand.hbm [shape: f32[1,512], index: 1, kind: input, shape index: {}]
  %s2 = inlined_call_operand.hbm [shape: f32[1,512], index: 2, kind: output, shape index: {}]
  %s3 = sld [smem:[#allocation0]]
  $region26: #{tpu_custom_call.1} parent=0
    _
  %s5 = ssub.s32 1, %s3
  %s6 = scalar_select 0, %s5, %s3
  $region1: #{tpu_custom_call.1} parent=0
    #allocation2 [shape = 'u8[2048]{0}', space=vmem, size = 0x800, scoped, tag = 'input window, operand 0, single buffered']
    #allocation3 [shape = 's32[1]{0}', space=sflag, size = 0x4, scoped, tag = 'scoped memory for tpu_custom_call.1']
    #allocation4 [shape = 's32[1]{0}', space=sflag, size = 0x4, scoped, tag = 'scoped memory for tpu_custom_call.1']
    #allocation5 [shape = 'u8[2048]{0}', space=vmem, size = 0x800, scoped, tag = 'input window, operand 1, single buffered']
    #allocation6 [shape = 's32[1]{0}', space=sflag, size = 0x4, scoped, tag = 'scoped memory for tpu_custom_call.1']
    #allocation7 [shape = 'u8[2048]{0}', space=vmem, size = 0x800, scoped, tag = 'output window, operand 0, single buffered']
    %7 = vsyncpa [#allocation3], 0
    %8 = vsyncpa [#allocation6], 0
    %9 = vsyncpa [#allocation4], 0
    // Predicated region
    $region2: #{tpu_custom_call.1} parent=1 // pred_check
      _
    $region3: #{tpu_custom_call.1} parent=1 // pred_check_branch
      %11 = sbr.rel (0) target = $region5
    $region4: #{tpu_custom_call.1} parent=1 // pred_region
      %s13 = ssub.s32 64, 64
      %14 = vsyncadd [#allocation3], %s13
      %s16 = sshll.u32 [#allocation2], 4
      %s17 = int_to_ptr.vmem [resolvable:$true] %s16
      %19 = dma.hbm_to_vmem [thread:$0]  %s0, 64, %s17, [#allocation3]
    $region5: #{tpu_custom_call.1} parent=1 // pred_fallthru
      _
    // Predicated region
    $region6: #{tpu_custom_call.1} parent=1 // pred_check
      _
    $region7: #{tpu_custom_call.1} parent=1 // pred_check_branch
      %21 = sbr.rel (0) target = $region9
    $region8: #{tpu_custom_call.1} parent=1 // pred_region
      %s23 = ssub.s32 64, 64
      %24 = vsyncadd [#allocation6], %s23
      %s26 = sshll.u32 [#allocation5], 4
      %s27 = int_to_ptr.vmem [resolvable:$true] %s26
      %29 = dma.hbm_to_vmem [thread:$0]  %s1, 64, %s27, [#allocation6]
    $region9: #{tpu_custom_call.1} parent=1 // pred_fallthru
      _
    // Predicated region
    $region10: #{tpu_custom_call.1} parent=1 // pred_check
      _
    $region11: #{tpu_custom_call.1} parent=1 // pred_check_branch
      %31 = sbr.rel (0) target = $region13
    $region12: #{tpu_custom_call.1} parent=1 // pred_region
      %32 = dma.done [#allocation3], 64
    $region13: #{tpu_custom_call.1} parent=1 // pred_fallthru
      _
    // Predicated region
    $region14: #{tpu_custom_call.1} parent=1 // pred_check
      _
    $region15: #{tpu_custom_call.1} parent=1 // pred_check_branch
      %34 = sbr.rel (0) target = $region17
    $region16: #{tpu_custom_call.1} parent=1 // pred_region
      %35 = dma.done [#allocation6], 64
    $region17: #{tpu_custom_call.1} parent=1 // pred_fallthru
      _
    %v36 = vld [vmem:[#allocation2] sm:$0xf]
    %v37 = vld [vmem:[#allocation5] sm:$0xf]
    %v38 = vmul.f32 %v36, %v37
    %v39 = vlaneseq
    %vm40 = vcmp.ge.s32.totalorder %v39, 0
    %vm41 = vcmp.lt.s32.totalorder %v39, 512
    %vm42 = vmand %vm40, %vm41
    %43 = vst.msk [vmem:[#allocation7] sm:$0xf] %vm42, %v38
    // Predicated region
    $region18: #{tpu_custom_call.1} parent=1 // pred_check
      _
    $region19: #{tpu_custom_call.1} parent=1 // pred_check_branch
      %45 = sbr.rel (0) target = $region21
    $region20: #{tpu_custom_call.1} parent=1 // pred_region
      %s47 = ssub.s32 64, 64
      %48 = vsyncadd [#allocation4], %s47
      %s50 = sshll.u32 [#allocation7], 4
      %s51 = int_to_ptr.vmem [resolvable:$true] %s50
      %53 = dma.vmem_to_hbm [thread:$0]  %s51, 64, %s2, [#allocation4]
    $region21: #{tpu_custom_call.1} parent=1 // pred_fallthru
      _
    // Predicated region
    $region22: #{tpu_custom_call.1} parent=1 // pred_check
      _
    $region23: #{tpu_custom_call.1} parent=1 // pred_check_branch
      %55 = sbr.rel (0) target = $region25
    $region24: #{tpu_custom_call.1} parent=1 // pred_region
      %56 = dma.done [#allocation4], 64
    $region25: #{tpu_custom_call.1} parent=1 // pred_fallthru
      _
    %57 = vsyncpa [#allocation3], 1
    %58 = vsyncpa [#allocation6], 1
    %59 = vsyncpa [#allocation4], 1

</llo_original>
